<compile_context>
chip_gen: v7x
topology: tpu7x:2x2x1
jax: 0.10.0
libtpu: 0.0.40
codegen_flags: <defaults>
</compile_context>

<pallas_src>
import functools
import math

import jax
import jax.numpy as jnp
from jax.experimental import pallas as pl
from jax.experimental.pallas import tpu as pltpu

LANE = 128
_CHUNK_ROWS = 256        # inner-loop chunk (sublane rows) for the dense path
_FLAT_TILE = 32 * 1024   # lane tile for the (rare) S % 128 != 0 fallback path
_MAX_ROWS = 4096         # upper bound on rows per block (diminishing returns)


def _vmem_capacity_bytes():
    try:
        return int(pltpu.get_tpu_info().vmem_capacity_bytes)
    except Exception:
        return 128 << 20  # v5e / v6e default


def _is_multi_tensorcore():
    """True on chips where one JAX device spans 2 TensorCores (v4/v5p/v7x):
    only there can a 'parallel' reduction split actually be sharded."""
    try:
        kind = jax.devices()[0].device_kind.lower()
    except Exception:
        return False
    return any(tag in kind for tag in ("v4", "v5p", "v7", "7x"))


def _sigmoid(x):
    # One transcendental (EUP) push instead of exp + divide.
    return 0.5 * (jnp.tanh(0.5 * x) + 1.0)


# ----------------------------------------------------------------------------
# Dense path: S % 128 == 0, layout (B, C, R, 128).
# ----------------------------------------------------------------------------
def _edice_dense_kernel(x_ref, t_ref, inter_ref, psq_ref, tsq_ref, *,
                        rows, sub, tail_valid_rows, do_sigmoid):
    """x_ref/t_ref: (C, rows, 128) tiles.  inter/psq/tsq: (C, sub, 128) f32
    accumulators, resident across the last ("arbitrary") grid axis."""
    s = pl.program_id(1)
    r = pl.program_id(2)

    @pl.when(r == 0)
    def _init():
        inter_ref[...] = jnp.zeros_like(inter_ref)
        psq_ref[...] = jnp.zeros_like(psq_ref)
        tsq_ref[...] = jnp.zeros_like(tsq_ref)

    def chunk_body(start, size, valid_rows):
        x = x_ref[:, pl.ds(start, size), :].astype(jnp.float32)
        t = t_ref[:, pl.ds(start, size), :].astype(jnp.float32)
        p = _sigmoid(x) if do_sigmoid else x
        if valid_rows is not None:
            # Row-tail mask: applied to p and t *before* any product so garbage
            # rows of the partial edge block can never leak NaN/Inf.
            row = jax.lax.broadcasted_iota(jnp.int32, (1, size, 1), 1)
            keep = (row + start) < valid_rows
            p = jnp.where(keep, p, 0.0)
            t = jnp.where(keep, t, 0.0)
        pt = p * t
        pp = p * p
        tt = t * t
        c = pt.shape[0]
        if sub == 8 and size % 8 == 0:
            # Deferred cross-sublane collapse: pure vreg adds.
            inter_ref[...] += jnp.sum(pt.reshape(c, size // 8, 8, LANE), axis=1)
            psq_ref[...] += jnp.sum(pp.reshape(c, size // 8, 8, LANE), axis=1)
            tsq_ref[...] += jnp.sum(tt.reshape(c, size // 8, 8, LANE), axis=1)
        else:
            inter_ref[:, 0:1, :] += jnp.sum(pt, axis=1, keepdims=True)
            psq_ref[:, 0:1, :] += jnp.sum(pp, axis=1, keepdims=True)
            tsq_ref[:, 0:1, :] += jnp.sum(tt, axis=1, keepdims=True)

    n_full = rows // _CHUNK_ROWS
    rem = rows - n_full * _CHUNK_ROWS

    def accumulate(valid_rows):
        if n_full == 1:
            chunk_body(0, _CHUNK_ROWS, valid_rows)
        elif n_full > 1:
            def body(i, carry):
                chunk_body(pl.multiple_of(i * _CHUNK_ROWS, _CHUNK_ROWS),
                           _CHUNK_ROWS, valid_rows)
                return carry
            jax.lax.fori_loop(0, n_full, body, 0)
        if rem:
            chunk_body(n_full * _CHUNK_ROWS, rem, valid_rows)

    if tail_valid_rows is None:
        accumulate(None)
    else:
        # Only the globally-last row tile has a tail; every other tile runs the
        # cheap unmasked path (no iota / where work).
        is_tail = jnp.logical_and(s == pl.num_programs(1) - 1,
                                  r == pl.num_programs(2) - 1)

        @pl.when(jnp.logical_not(is_tail))
        def _full_tiles():
            accumulate(None)

        @pl.when(is_tail)
        def _tail_tile():
            accumulate(tail_valid_rows)


def _edice_dense_partials(x, t, max_rows_per_tile, do_sigmoid):
    B, C, S = x.shape
    R = S // LANE
    x = x.reshape(B, C, R, LANE)
    t = t.reshape(B, C, R, LANE)

    cap = _vmem_capacity_bytes()
    itemsize_sum = x.dtype.itemsize + t.dtype.itemsize
    # Sublane packing of the narrowest input dtype (8 for f32, 16 bf16, 32 i8).
    pack = max(8, 32 // min(x.dtype.itemsize, t.dtype.itemsize))

    # Largest row tile whose double-buffered input blocks use <= ~40% of VMEM.
    rt_cap = (4 * cap // 10) // (2 * C * LANE * itemsize_sum)
    rt_cap = max(pack, min(int(rt_cap), _MAX_ROWS))
    if max_rows_per_tile is not None:
        rt_cap = max(pack, min(rt_cap, int(max_rows_per_tile)))

    if R <= rt_cap:
        RT = R                          # single row tile per batch (full-dim block)
    else:
        RT = (rt_cap // pack) * pack    # 8-divisible row tile

    SUB = 8 if RT >= 8 else 1
    NT_R = pl.cdiv(R, RT)
    tail = R - (NT_R - 1) * RT
    tail_valid_rows = None if tail == RT else tail

    # 2-way reduction split: only useful on multi-TC chips when the batch axis
    # cannot feed both cores, and only when it costs no redundant DMA.
    nsplit = 2 if (_is_multi_tensorcore() and B == 1
                   and NT_R >= 2 and NT_R % 2 == 0) else 1
    nt_sub = NT_R // nsplit

    def in_map(b, s, r):
        return (b, 0, s * nt_sub + r, 0)

    def out_map(b, s, r):
        return (b * nsplit + s, 0, 0, 0)

    part = jax.ShapeDtypeStruct((B * nsplit, C, SUB, LANE), jnp.float32)

    in_bytes = C * RT * LANE * itemsize_sum
    tmp_bytes = 10 * C * min(RT, _CHUNK_ROWS) * LANE * 4
    est = 2 * in_bytes + tmp_bytes + (4 << 20)
    vmem_limit = int(min(3 * cap // 4, max(32 << 20, est)))

    kernel = functools.partial(_edice_dense_kernel, rows=RT, sub=SUB,
                               tail_valid_rows=tail_valid_rows,
                               do_sigmoid=do_sigmoid)

    inter_p, psq_p, tsq_p = pl.pallas_call(
        kernel,
        out_shape=(part, part, part),
        grid_spec=pltpu.PrefetchScalarGridSpec(
            num_scalar_prefetch=0,
            grid=(B, nsplit, nt_sub),
            in_specs=[pl.BlockSpec((None, C, RT, LANE), in_map),
                      pl.BlockSpec((None, C, RT, LANE), in_map)],
            out_specs=[pl.BlockSpec((None, C, SUB, LANE), out_map),
                       pl.BlockSpec((None, C, SUB, LANE), out_map),
                       pl.BlockSpec((None, C, SUB, LANE), out_map)],
        ),
        compiler_params=pltpu.CompilerParams(
            dimension_semantics=("parallel", "parallel", "arbitrary"),
            vmem_limit_bytes=vmem_limit,
        ),
    )(x, t)

    inter = jnp.sum(inter_p, axis=(0, 2, 3))
    psq = jnp.sum(psq_p, axis=(0, 2, 3))
    tsq = jnp.sum(tsq_p, axis=(0, 2, 3))
    return inter, psq, tsq


# ----------------------------------------------------------------------------
# Fallback path: S % 128 != 0.  Streams the native (B, C, S) layout and masks
# the lane tail in-kernel -- no extra full-tensor pad/copy pass through HBM.
# ----------------------------------------------------------------------------
def _edice_flat_kernel(x_ref, t_ref, inter_ref, psq_ref, tsq_ref, *,
                       ts, s_total, needs_mask, do_sigmoid):
    """x_ref/t_ref: (C, TS) tiles.  inter/psq/tsq: (C, 1) f32 per-channel
    partial sums, resident across the lane-tile axis."""
    k = pl.program_id(1)

    @pl.when(k == 0)
    def _init():
        inter_ref[...] = jnp.zeros_like(inter_ref)
        psq_ref[...] = jnp.zeros_like(psq_ref)
        tsq_ref[...] = jnp.zeros_like(tsq_ref)

    def accumulate(masked):
        x = x_ref[...].astype(jnp.float32)
        t = t_ref[...].astype(jnp.float32)
        p = _sigmoid(x) if do_sigmoid else x
        if masked:
            pos = jax.lax.broadcasted_iota(jnp.int32, x.shape, 1)
            keep = (k * ts + pos) < s_total
            p = jnp.where(keep, p, 0.0)
            t = jnp.where(keep, t, 0.0)
        inter_ref[...] += jnp.sum(p * t, axis=1, keepdims=True)
        psq_ref[...] += jnp.sum(p * p, axis=1, keepdims=True)
        tsq_ref[...] += jnp.sum(t * t, axis=1, keepdims=True)

    if not needs_mask:
        accumulate(False)
    else:
        is_tail = k == pl.num_programs(1) - 1

        @pl.when(jnp.logical_not(is_tail))
        def _full_tiles():
            accumulate(False)

        @pl.when(is_tail)
        def _tail_tile():
            accumulate(True)


def _edice_flat_partials(x, t, do_sigmoid):
    B, C, S = x.shape
    if S <= _FLAT_TILE:
        TS, NT, needs_mask = S, 1, False     # one full-extent block per batch
    else:
        TS = _FLAT_TILE
        NT = int(pl.cdiv(S, TS))
        needs_mask = (S % TS) != 0

    part = jax.ShapeDtypeStruct((B, C, 1), jnp.float32)
    cap = _vmem_capacity_bytes()
    vmem_limit = int(min(3 * cap // 4, 64 << 20))

    kernel = functools.partial(_edice_flat_kernel, ts=TS, s_total=S,
                               needs_mask=needs_mask, do_sigmoid=do_sigmoid)

    inter_p, psq_p, tsq_p = pl.pallas_call(
        kernel,
        out_shape=(part, part, part),
        grid_spec=pltpu.PrefetchScalarGridSpec(
            num_scalar_prefetch=0,
            grid=(B, NT),
            in_specs=[pl.BlockSpec((None, C, TS), lambda b, k: (b, 0, k)),
                      pl.BlockSpec((None, C, TS), lambda b, k: (b, 0, k))],
            out_specs=[pl.BlockSpec((None, C, 1), lambda b, k: (b, 0, 0)),
                       pl.BlockSpec((None, C, 1), lambda b, k: (b, 0, 0)),
                       pl.BlockSpec((None, C, 1), lambda b, k: (b, 0, 0))],
        ),
        compiler_params=pltpu.CompilerParams(
            dimension_semantics=("parallel", "arbitrary"),
            vmem_limit_bytes=vmem_limit,
        ),
    )(x, t)

    inter = jnp.sum(inter_p, axis=(0, 2))
    psq = jnp.sum(psq_p, axis=(0, 2))
    tsq = jnp.sum(tsq_p, axis=(0, 2))
    return inter, psq, tsq


# ----------------------------------------------------------------------------
# Public entry point.
# ----------------------------------------------------------------------------
def edice_loss(inputs, target, *, smooth=1.0, do_sigmoid=True,
               max_rows_per_tile=None):
    """EDiceLoss().forward(inputs, target); inputs/target: (B, C, *spatial)."""
    assert inputs.shape == target.shape and inputs.ndim >= 3
    B, C = inputs.shape[:2]
    S = int(math.prod(inputs.shape[2:]))

    # Free, contiguous reshape; keep native dtypes (cast happens on the VPU).
    x = inputs.reshape(B, C, S)
    t = target.reshape(B, C, S)

    if S % LANE == 0:
        inter, psq, tsq = _edice_dense_partials(x, t, max_rows_per_tile, do_sigmoid)
    else:
        inter, psq, tsq = _edice_flat_partials(x, t, do_sigmoid)

    dice = (2.0 * inter + smooth) / (psq + tsq + smooth)
    return jnp.mean(1.0 - dice)


def _edice_loss_ref(inputs, target, smooth=1.0):
    """Pure-JAX reference mirroring the PyTorch forward()."""
    C = inputs.shape[1]
    total = 0.0
    for i in range(C):
        p = jax.nn.sigmoid(inputs[:, i].astype(jnp.float32))
        t = target[:, i].astype(jnp.float32)
        inter = jnp.sum(p * t)
        d = (2.0 * inter + smooth) / (jnp.sum(p * p) + jnp.sum(t * t) + smooth)
        total = total + (1.0 - d)
    return total / C


# TODO(synk): EDiceLoss.metric()/metric_mode (0.5 thresholding + per-patient
# empty-label early return with a host-side print) is data-dependent control
# flow and is not translated; only the forward() training loss is implemented.

if __name__ == "__main__":
    key = jax.random.PRNGKey(0)

    def make(shape, k):
        k1, k2 = jax.random.split(k)
        logits = jax.random.normal(k1, shape, dtype=jnp.float32)
        tgt = (jax.random.uniform(k2, shape) > 0.5).astype(jnp.float32)
        return logits, tgt

    keys = jax.random.split(key, 6)
    cases = [
        # (shape, kwargs) -- BraTS-style 3 labels (ET, TC, WT).
        ((2, 3, 16, 16), {}),                         # dense path, tiny
        ((1, 3, 10, 10), {}),                         # S % 128 != 0 -> flat path
        ((2, 3, 48, 48), {"max_rows_per_tile": 8}),   # multi-tile + row-tail mask
        ((1, 3, 64, 64), {"max_rows_per_tile": 8}),   # B=1: 2-way split on multi-TC chips
        ((1, 3, 256, 256), {}),                       # exercises the inner chunk loop
        ((1, 3, 182, 182), {}),                       # flat path with lane-tail mask
    ]
    for (shape, kwargs), k in zip(cases, keys):
        x, t = make(shape, k)
        out = jax.block_until_ready(edice_loss(x, t, **kwargs))
        ref = _edice_loss_ref(x, t)
        assert jnp.allclose(out, ref, atol=1e-5, rtol=1e-5), (shape, out, ref)

    print("KERNEL_OK")
</pallas_src>

<mosaic_0001>
module attributes {stable_mosaic.version = 11 : i64} {
  func.func @_edice_dense_kernel(%arg0: i32, %arg1: i32, %arg2: i32, %arg3: memref<1x3x2x128xf32, #tpu.memory_space<vmem>>, %arg4: memref<1x3x2x128xf32, #tpu.memory_space<vmem>>, %arg5: memref<1x3x1x128xf32, #tpu.memory_space<vmem>>, %arg6: memref<1x3x1x128xf32, #tpu.memory_space<vmem>>, %arg7: memref<1x3x1x128xf32, #tpu.memory_space<vmem>>) attributes {dimension_semantics = [#tpu.dimension_semantics<parallel>, #tpu.dimension_semantics<parallel>, #tpu.dimension_semantics<arbitrary>], iteration_bounds = array<i64: 2, 1, 1>, scalar_prefetch = 0 : i64, scratch_operands = 0 : i64, tpu.core_type = #tpu.core_type<tc>, window_params = [{transform_indices = @transform_0, window_bounds = array<i64: 1, 3, 2, 128>}, {transform_indices = @transform_1, window_bounds = array<i64: 1, 3, 2, 128>}, {transform_indices = @transform_2, window_bounds = array<i64: 1, 3, 1, 128>}, {transform_indices = @transform_3, window_bounds = array<i64: 1, 3, 1, 128>}, {transform_indices = @transform_4, window_bounds = array<i64: 1, 3, 1, 128>}]} {
    %c0_i32 = arith.constant 0 : i32
    %0 = arith.cmpi eq, %arg2, %c0_i32 : i32
    %1 = arith.extui %0 : i1 to i32
    %c0_i32_0 = arith.constant 0 : i32
    %2 = arith.cmpi ne, %1, %c0_i32_0 : i32
    scf.if %2 {
      %cst_37 = arith.constant 0.000000e+00 : f32
      %41 = vector.broadcast %cst_37 : f32 to vector<3x1x128xf32>
      %c0_38 = arith.constant 0 : index
      %c0_39 = arith.constant 0 : index
      %c0_40 = arith.constant 0 : index
      %c0_41 = arith.constant 0 : index
      %42 = vector.load %arg5[%c0_38, %c0_39, %c0_40, %c0_41] : memref<1x3x1x128xf32, #tpu.memory_space<vmem>>, vector<1x3x1x128xf32>
      %43 = vector.shape_cast %42 : vector<1x3x1x128xf32> to vector<3x1x128xf32>
      %44 = vector.shape_cast %41 : vector<3x1x128xf32> to vector<1x3x1x128xf32>
      tpu.vector_store %arg5[%c0_38, %c0_39, %c0_40, %c0_41], %44 {strides = array<i32>} : memref<1x3x1x128xf32, #tpu.memory_space<vmem>>, vector<1x3x1x128xf32>,
      %cst_42 = arith.constant 0.000000e+00 : f32
      %45 = vector.broadcast %cst_42 : f32 to vector<3x1x128xf32>
      %c0_43 = arith.constant 0 : index
      %c0_44 = arith.constant 0 : index
      %c0_45 = arith.constant 0 : index
      %c0_46 = arith.constant 0 : index
      %46 = vector.load %arg6[%c0_43, %c0_44, %c0_45, %c0_46] : memref<1x3x1x128xf32, #tpu.memory_space<vmem>>, vector<1x3x1x128xf32>
      %47 = vector.shape_cast %46 : vector<1x3x1x128xf32> to vector<3x1x128xf32>
      %48 = vector.shape_cast %45 : vector<3x1x128xf32> to vector<1x3x1x128xf32>
      tpu.vector_store %arg6[%c0_43, %c0_44, %c0_45, %c0_46], %48 {strides = array<i32>} : memref<1x3x1x128xf32, #tpu.memory_space<vmem>>, vector<1x3x1x128xf32>,
      %cst_47 = arith.constant 0.000000e+00 : f32
      %49 = vector.broadcast %cst_47 : f32 to vector<3x1x128xf32>
      %c0_48 = arith.constant 0 : index
      %c0_49 = arith.constant 0 : index
      %c0_50 = arith.constant 0 : index
      %c0_51 = arith.constant 0 : index
      %50 = vector.load %arg7[%c0_48, %c0_49, %c0_50, %c0_51] : memref<1x3x1x128xf32, #tpu.memory_space<vmem>>, vector<1x3x1x128xf32>
      %51 = vector.shape_cast %50 : vector<1x3x1x128xf32> to vector<3x1x128xf32>
      %52 = vector.shape_cast %49 : vector<3x1x128xf32> to vector<1x3x1x128xf32>
      tpu.vector_store %arg7[%c0_48, %c0_49, %c0_50, %c0_51], %52 {strides = array<i32>} : memref<1x3x1x128xf32, #tpu.memory_space<vmem>>, vector<1x3x1x128xf32>,
    } else {
    }
    %c0 = arith.constant 0 : index
    %c0_1 = arith.constant 0 : index
    %c0_2 = arith.constant 0 : index
    %c0_3 = arith.constant 0 : index
    %3 = vector.load %arg3[%c0, %c0_1, %c0_2, %c0_3] : memref<1x3x2x128xf32, #tpu.memory_space<vmem>>, vector<1x3x2x128xf32>
    %4 = vector.shape_cast %3 : vector<1x3x2x128xf32> to vector<3x2x128xf32>
    %c0_4 = arith.constant 0 : index
    %c0_5 = arith.constant 0 : index
    %c0_6 = arith.constant 0 : index
    %c0_7 = arith.constant 0 : index
    %5 = vector.load %arg4[%c0_4, %c0_5, %c0_6, %c0_7] : memref<1x3x2x128xf32, #tpu.memory_space<vmem>>, vector<1x3x2x128xf32>
    %6 = vector.shape_cast %5 : vector<1x3x2x128xf32> to vector<3x2x128xf32>
    %cst = arith.constant 5.000000e-01 : f32
    %7 = vector.broadcast %cst : f32 to vector<3x2x128xf32>
    %8 = arith.mulf %7, %4 : vector<3x2x128xf32>
    %9 = math.tanh %8 : vector<3x2x128xf32>
    %cst_8 = arith.constant 1.000000e+00 : f32
    %10 = vector.broadcast %cst_8 : f32 to vector<3x2x128xf32>
    %11 = arith.addf %9, %10 : vector<3x2x128xf32>
    %cst_9 = arith.constant 5.000000e-01 : f32
    %12 = vector.broadcast %cst_9 : f32 to vector<3x2x128xf32>
    %13 = arith.mulf %12, %11 : vector<3x2x128xf32>
    %14 = arith.mulf %13, %6 : vector<3x2x128xf32>
    %15 = arith.mulf %13, %13 : vector<3x2x128xf32>
    %16 = arith.mulf %6, %6 : vector<3x2x128xf32>
    %c0_10 = arith.constant 0 : index
    %c0_11 = arith.constant 0 : index
    %c0_12 = arith.constant 0 : index
    %c0_13 = arith.constant 0 : index
    %17 = vector.load %arg5[%c0_10, %c0_11, %c0_12, %c0_13] : memref<1x3x1x128xf32, #tpu.memory_space<vmem>>, vector<1x3x1x128xf32>
    %18 = vector.shape_cast %17 : vector<1x3x1x128xf32> to vector<3x1x128xf32>
    %cst_14 = arith.constant dense<0.000000e+00> : vector<3x128xf32>
    %19 = vector.multi_reduction <add>, %14, %cst_14 [1] : vector<3x2x128xf32> to vector<3x128xf32>
    %20 = vector.shape_cast %19 : vector<3x128xf32> to vector<3x1x128xf32>
    %21 = arith.addf %18, %20 : vector<3x1x128xf32>
    %c0_15 = arith.constant 0 : index
    %c0_16 = arith.constant 0 : index
    %c0_17 = arith.constant 0 : index
    %c0_18 = arith.constant 0 : index
    %22 = vector.load %arg5[%c0_15, %c0_16, %c0_17, %c0_18] : memref<1x3x1x128xf32, #tpu.memory_space<vmem>>, vector<1x3x1x128xf32>
    %23 = vector.shape_cast %22 : vector<1x3x1x128xf32> to vector<3x1x128xf32>
    %24 = vector.shape_cast %21 : vector<3x1x128xf32> to vector<1x3x1x128xf32>
    tpu.vector_store %arg5[%c0_15, %c0_16, %c0_17, %c0_18], %24 {strides = array<i32>} : memref<1x3x1x128xf32, #tpu.memory_space<vmem>>, vector<1x3x1x128xf32>,
    %c0_19 = arith.constant 0 : index
    %c0_20 = arith.constant 0 : index
    %c0_21 = arith.constant 0 : index
    %c0_22 = arith.constant 0 : index
    %25 = vector.load %arg6[%c0_19, %c0_20, %c0_21, %c0_22] : memref<1x3x1x128xf32, #tpu.memory_space<vmem>>, vector<1x3x1x128xf32>
    %26 = vector.shape_cast %25 : vector<1x3x1x128xf32> to vector<3x1x128xf32>
    %cst_23 = arith.constant dense<0.000000e+00> : vector<3x128xf32>
    %27 = vector.multi_reduction <add>, %15, %cst_23 [1] : vector<3x2x128xf32> to vector<3x128xf32>
    %28 = vector.shape_cast %27 : vector<3x128xf32> to vector<3x1x128xf32>
    %29 = arith.addf %26, %28 : vector<3x1x128xf32>
    %c0_24 = arith.constant 0 : index
    %c0_25 = arith.constant 0 : index
    %c0_26 = arith.constant 0 : index
    %c0_27 = arith.constant 0 : index
    %30 = vector.load %arg6[%c0_24, %c0_25, %c0_26, %c0_27] : memref<1x3x1x128xf32, #tpu.memory_space<vmem>>, vector<1x3x1x128xf32>
    %31 = vector.shape_cast %30 : vector<1x3x1x128xf32> to vector<3x1x128xf32>
    %32 = vector.shape_cast %29 : vector<3x1x128xf32> to vector<1x3x1x128xf32>
    tpu.vector_store %arg6[%c0_24, %c0_25, %c0_26, %c0_27], %32 {strides = array<i32>} : memref<1x3x1x128xf32, #tpu.memory_space<vmem>>, vector<1x3x1x128xf32>,
    %c0_28 = arith.constant 0 : index
    %c0_29 = arith.constant 0 : index
    %c0_30 = arith.constant 0 : index
    %c0_31 = arith.constant 0 : index
    %33 = vector.load %arg7[%c0_28, %c0_29, %c0_30, %c0_31] : memref<1x3x1x128xf32, #tpu.memory_space<vmem>>, vector<1x3x1x128xf32>
    %34 = vector.shape_cast %33 : vector<1x3x1x128xf32> to vector<3x1x128xf32>
    %cst_32 = arith.constant dense<0.000000e+00> : vector<3x128xf32>
    %35 = vector.multi_reduction <add>, %16, %cst_32 [1] : vector<3x2x128xf32> to vector<3x128xf32>
    %36 = vector.shape_cast %35 : vector<3x128xf32> to vector<3x1x128xf32>
    %37 = arith.addf %34, %36 : vector<3x1x128xf32>
    %c0_33 = arith.constant 0 : index
    %c0_34 = arith.constant 0 : index
    %c0_35 = arith.constant 0 : index
    %c0_36 = arith.constant 0 : index
    %38 = vector.load %arg7[%c0_33, %c0_34, %c0_35, %c0_36] : memref<1x3x1x128xf32, #tpu.memory_space<vmem>>, vector<1x3x1x128xf32>
    %39 = vector.shape_cast %38 : vector<1x3x1x128xf32> to vector<3x1x128xf32>
    %40 = vector.shape_cast %37 : vector<3x1x128xf32> to vector<1x3x1x128xf32>
    tpu.vector_store %arg7[%c0_33, %c0_34, %c0_35, %c0_36], %40 {strides = array<i32>} : memref<1x3x1x128xf32, #tpu.memory_space<vmem>>, vector<1x3x1x128xf32>,
    return
  }
  func.func @transform_0(%arg0: i32, %arg1: i32, %arg2: i32) -> (i32, i32, i32, i32) {
    %c1_i32 = arith.constant 1 : i32
    %0 = arith.muli %arg1, %c1_i32 : i32
    %1 = arith.addi %0, %arg2 : i32
    %c0_i32 = arith.constant 0 : i32
    %c0_i32_0 = arith.constant 0 : i32
    %c0_i32_1 = arith.constant 0 : i32
    return %arg0, %c0_i32, %1, %c0_i32_0 : i32, i32, i32, i32
  }
  func.func @transform_1(%arg0: i32, %arg1: i32, %arg2: i32) -> (i32, i32, i32, i32) {
    %c1_i32 = arith.constant 1 : i32
    %0 = arith.muli %arg1, %c1_i32 : i32
    %1 = arith.addi %0, %arg2 : i32
    %c0_i32 = arith.constant 0 : i32
    %c0_i32_0 = arith.constant 0 : i32
    %c0_i32_1 = arith.constant 0 : i32
    return %arg0, %c0_i32, %1, %c0_i32_0 : i32, i32, i32, i32
  }
  func.func @transform_2(%arg0: i32, %arg1: i32, %arg2: i32) -> (i32, i32, i32, i32) {
    %c1_i32 = arith.constant 1 : i32
    %0 = arith.muli %arg0, %c1_i32 : i32
    %1 = arith.addi %0, %arg1 : i32
    %c0_i32 = arith.constant 0 : i32
    %c0_i32_0 = arith.constant 0 : i32
    %c0_i32_1 = arith.constant 0 : i32
    %c0_i32_2 = arith.constant 0 : i32
    return %1, %c0_i32, %c0_i32_0, %c0_i32_1 : i32, i32, i32, i32
  }
  func.func @transform_3(%arg0: i32, %arg1: i32, %arg2: i32) -> (i32, i32, i32, i32) {
    %c1_i32 = arith.constant 1 : i32
    %0 = arith.muli %arg0, %c1_i32 : i32
    %1 = arith.addi %0, %arg1 : i32
    %c0_i32 = arith.constant 0 : i32
    %c0_i32_0 = arith.constant 0 : i32
    %c0_i32_1 = arith.constant 0 : i32
    %c0_i32_2 = arith.constant 0 : i32
    return %1, %c0_i32, %c0_i32_0, %c0_i32_1 : i32, i32, i32, i32
  }
  func.func @transform_4(%arg0: i32, %arg1: i32, %arg2: i32) -> (i32, i32, i32, i32) {
    %c1_i32 = arith.constant 1 : i32
    %0 = arith.muli %arg0, %c1_i32 : i32
    %1 = arith.addi %0, %arg1 : i32
    %c0_i32 = arith.constant 0 : i32
    %c0_i32_0 = arith.constant 0 : i32
    %c0_i32_1 = arith.constant 0 : i32
    %c0_i32_2 = arith.constant 0 : i32
    return %1, %c0_i32, %c0_i32_0, %c0_i32_1 : i32, i32, i32, i32
  }
}

</mosaic_0001>

<llo_original>
// kernel: tpu_custom_call.1
$region0: #{tpu_custom_call.1}
  #allocation0 [shape = 'u32[]', space=smem, size = 0x4, offset = 0x4, fixed_abs, tag = 'smem constant byte address 0x4 - core index']
  #allocation1 [shape = 'u32[144,128]{1,0:T(1,128)}', space=vmem, size = 0x12000, scoped, tag = 'internal scratch']
  %s0 = inlined_call_operand.hbm [shape: f32[2,3,2,128], index: 0, kind: input, shape index: {}]
  %s1 = inlined_call_operand.hbm [shape: f32[2,3,2,128], index: 1, kind: input, shape index: {}]
  %s2 = inlined_call_operand.hbm [shape: f32[2,3,1,128], index: 2, kind: output, shape index: {0}]
  %s3 = inlined_call_operand.hbm [shape: f32[2,3,1,128], index: 3, kind: output, shape index: {1}]
  %s4 = inlined_call_operand.hbm [shape: f32[2,3,1,128], index: 4, kind: output, shape index: {2}]
  %5 = xla_tuple %s2, %s3, %s4
  %s6 = sld [smem:[#allocation0]]
  $region69: #{tpu_custom_call.1} parent=0
    _
  %s8 = ssub.s32 1, %s6
  %s9 = scalar_select 0, %s8, %s6
  $region1: #{tpu_custom_call.1} parent=0
    #allocation2 [shape = 'u8[6144]{0}', space=vmem, size = 0x1800, scoped, tag = 'input window, operand 0']
    #allocation3 [shape = 's32[2]{0}', space=sflag, size = 0x8, scoped, tag = 'scoped memory for tpu_custom_call.1']
    #allocation4 [shape = 's32[2]{0}', space=sflag, size = 0x8, scoped, tag = 'scoped memory for tpu_custom_call.1']
    #allocation5 [shape = 'u8[6144]{0}', space=vmem, size = 0x1800, scoped, tag = 'input window, operand 1']
    #allocation6 [shape = 's32[2]{0}', space=sflag, size = 0x8, scoped, tag = 'scoped memory for tpu_custom_call.1']
    #allocation7 [shape = 'u8[3072]{0}', space=vmem, size = 0xc00, scoped, tag = 'output window, operand 0']
    #allocation8 [shape = 'u8[3072]{0}', space=vmem, size = 0xc00, scoped, tag = 'output window, operand 1']
    #allocation9 [shape = 's32[2]{0}', space=sflag, size = 0x8, scoped, tag = 'scoped memory for tpu_custom_call.1']
    #allocation10 [shape = 'u8[3072]{0}', space=vmem, size = 0xc00, scoped, tag = 'output window, operand 2']
    %10 = vsyncpa [#allocation3], 0
    %s11 = scalar_lea.sflag [#allocation3], 1
    %12 = vsyncpa %s11, 0
    %13 = vsyncpa [#allocation6], 0
    %s14 = scalar_lea.sflag [#allocation6], 1
    %15 = vsyncpa %s14, 0
    %16 = vsyncpa [#allocation4], 0
    %s17 = scalar_lea.sflag [#allocation4], 1
    %18 = vsyncpa %s17, 0
    %19 = vsyncpa [#allocation9], 0
    %s20 = scalar_lea.sflag [#allocation9], 1
    %21 = vsyncpa %s20, 0
    loop: start=0, step=1, limit=4
    $region2: #{tpu_custom_call.1} parent=1 // loop_pre_header
      _
    $region3: #{tpu_custom_call.1} parent=1 // loop_header
      %s23 = sphi 0, %s27
      %p24 = scmp.ge.s32.totalorder %s23, 4
      %s30 = sphi 0, %s49
      %s31 = sphi 0, %s45
      %s32 = sphi 0, %s41
      %s33 = sphi 0, %s30
      %s34 = sphi 0, %s31
      %s35 = sphi 0, %s32
      %s36 = sphi 0, %s33
      %s37 = sphi 0, %s34
      %s38 = sphi 0, %s35
      %s56 = sphi 0, %s58
      %s59 = sphi 0, %s56
      %s60 = sphi 0, %s59
      %s76 = sphi 0, %s60
      %s86 = sphi 0, %s88
      %s89 = sphi 0, %s86
      %s90 = sphi 0, %s89
      %s106 = sphi 0, %s90
      %s114 = sphi 0, %s116
      %s117 = sphi 0, %s114
      %s118 = sphi 0, %s117
      %s134 = sphi 0, %s118
      %s142 = sphi 0, %s144
      %s145 = sphi 0, %s142
      %s146 = sphi 0, %s145
      %s162 = sphi 0, %s146
      %s170 = sphi 0, %s172
      %s173 = sphi 0, %s170
      %s174 = sphi 0, %s173
      %s190 = sphi 0, %s174
    $region4: #{tpu_custom_call.1} parent=1 // loop_header_branch
      %26 = sbr.rel (%p24) target = $region8
    $region5: #{tpu_custom_call.1} parent=1 // loop_body
      %s28 = ssub.s32 %s23, 1
      %s29 = ssub.s32 %s23, 2
      %s39 = sadd.s32 1, %s32
      %p40 = scmp.ge.s32.totalorder %s39, 1
      %s41 = scalar_select %p40, 0, %s39
      %s42 = sadd.s32 1, %s31
      %s43 = scalar_select %p40, %s42, %s31
      %p44 = scmp.ge.s32.totalorder %s43, 1
      %s45 = scalar_select %p44, 0, %s43
      %s46 = sadd.s32 1, %s30
      %s47 = scalar_select %p44, %s46, %s30
      %p48 = scmp.ge.s32.totalorder %s47, 2
      %s49 = scalar_select %p48, 0, %s47
      %s50 = sadd.s32 %s31, %s32
      %s51 = sadd.s32 %s45, %s41
      %s52 = ssub.s32 %s30, %s49
      %s53 = ssub.s32 %s50, %s51
      %s54 = sor.u32 %s52, %s53
      %p55 = scmp.eq.s32.totalorder %s54, 0
      %s57 = sadd.s32 %s56, 1
      %s58 = scalar_select %p55, %s56, %s57
      %p61 = pneg %p55
      %p62 = scmp.eq.s32.totalorder %s23, 1
      %p63 = por %p61, %p62
      %p64 = scmp.ne.s32.totalorder %s56, %s59
      %p65 = scmp.eq.s32.totalorder %s23, 0
      %p66 = por %p64, %p65
      %p67 = scmp.ne.s32.totalorder %s56, %s59
      %p68 = scmp.eq.s32.totalorder %s28, 1
      %p69 = por %p67, %p68
      %p70 = scmp.ne.s32.totalorder %s59, %s60
      %p71 = scmp.eq.s32.totalorder %s28, 0
      %p72 = por %p70, %p71
      %p73 = scmp.ne.s32.totalorder %s59, %s60
      %p74 = scmp.eq.s32.totalorder %s29, 1
      %p75 = por %p73, %p74
      %p77 = scmp.ne.s32.totalorder %s60, %s76
      %p78 = scmp.eq.s32.totalorder %s29, 0
      %p79 = por %p77, %p78
      %s80 = sadd.s32 %s31, %s32
      %s81 = sadd.s32 %s45, %s41
      %s82 = ssub.s32 %s30, %s49
      %s83 = ssub.s32 %s80, %s81
      %s84 = sor.u32 %s82, %s83
      %p85 = scmp.eq.s32.totalorder %s84, 0
      %s87 = sadd.s32 %s86, 1
      %s88 = scalar_select %p85, %s86, %s87
      %p91 = pneg %p85
      %p92 = scmp.eq.s32.totalorder %s23, 1
      %p93 = por %p91, %p92
      %p94 = scmp.ne.s32.totalorder %s86, %s89
      %p95 = scmp.eq.s32.totalorder %s23, 0
      %p96 = por %p94, %p95
      %p97 = scmp.ne.s32.totalorder %s86, %s89
      %p98 = scmp.eq.s32.totalorder %s28, 1
      %p99 = por %p97, %p98
      %p100 = scmp.ne.s32.totalorder %s89, %s90
      %p101 = scmp.eq.s32.totalorder %s28, 0
      %p102 = por %p100, %p101
      %p103 = scmp.ne.s32.totalorder %s89, %s90
      %p104 = scmp.eq.s32.totalorder %s29, 1
      %p105 = por %p103, %p104
      %p107 = scmp.ne.s32.totalorder %s90, %s106
      %p108 = scmp.eq.s32.totalorder %s29, 0
      %p109 = por %p107, %p108
      %s110 = sadd.s32 %s30, %s31
      %s111 = sadd.s32 %s49, %s45
      %s112 = ssub.s32 %s110, %s111
      %p113 = scmp.eq.s32.totalorder %s112, 0
      %s115 = sadd.s32 %s114, 1
      %s116 = scalar_select %p113, %s114, %s115
      %p119 = pneg %p113
      %p120 = scmp.eq.s32.totalorder %s23, 1
      %p121 = por %p119, %p120
      %p122 = scmp.ne.s32.totalorder %s114, %s117
      %p123 = scmp.eq.s32.totalorder %s23, 0
      %p124 = por %p122, %p123
      %p125 = scmp.ne.s32.totalorder %s114, %s117
      %p126 = scmp.eq.s32.totalorder %s28, 1
      %p127 = por %p125, %p126
      %p128 = scmp.ne.s32.totalorder %s117, %s118
      %p129 = scmp.eq.s32.totalorder %s28, 0
      %p130 = por %p128, %p129
      %p131 = scmp.ne.s32.totalorder %s117, %s118
      %p132 = scmp.eq.s32.totalorder %s29, 1
      %p133 = por %p131, %p132
      %p135 = scmp.ne.s32.totalorder %s118, %s134
      %p136 = scmp.eq.s32.totalorder %s29, 0
      %p137 = por %p135, %p136
      %s138 = sadd.s32 %s30, %s31
      %s139 = sadd.s32 %s49, %s45
      %s140 = ssub.s32 %s138, %s139
      %p141 = scmp.eq.s32.totalorder %s140, 0
      %s143 = sadd.s32 %s142, 1
      %s144 = scalar_select %p141, %s142, %s143
      %p147 = pneg %p141
      %p148 = scmp.eq.s32.totalorder %s23, 1
      %p149 = por %p147, %p148
      %p150 = scmp.ne.s32.totalorder %s142, %s145
      %p151 = scmp.eq.s32.totalorder %s23, 0
      %p152 = por %p150, %p151
      %p153 = scmp.ne.s32.totalorder %s142, %s145
      %p154 = scmp.eq.s32.totalorder %s28, 1
      %p155 = por %p153, %p154
      %p156 = scmp.ne.s32.totalorder %s145, %s146
      %p157 = scmp.eq.s32.totalorder %s28, 0
      %p158 = por %p156, %p157
      %p159 = scmp.ne.s32.totalorder %s145, %s146
      %p160 = scmp.eq.s32.totalorder %s29, 1
      %p161 = por %p159, %p160
      %p163 = scmp.ne.s32.totalorder %s146, %s162
      %p164 = scmp.eq.s32.totalorder %s29, 0
      %p165 = por %p163, %p164
      %s166 = sadd.s32 %s30, %s31
      %s167 = sadd.s32 %s49, %s45
      %s168 = ssub.s32 %s166, %s167
      %p169 = scmp.eq.s32.totalorder %s168, 0
      %s171 = sadd.s32 %s170, 1
      %s172 = scalar_select %p169, %s170, %s171
      %p175 = pneg %p169
      %p176 = scmp.eq.s32.totalorder %s23, 1
      %p177 = por %p175, %p176
      %p178 = scmp.ne.s32.totalorder %s170, %s173
      %p179 = scmp.eq.s32.totalorder %s23, 0
      %p180 = por %p178, %p179
      %p181 = scmp.ne.s32.totalorder %s170, %s173
      %p182 = scmp.eq.s32.totalorder %s28, 1
      %p183 = por %p181, %p182
      %p184 = scmp.ne.s32.totalorder %s173, %s174
      %p185 = scmp.eq.s32.totalorder %s28, 0
      %p186 = por %p184, %p185
      %p187 = scmp.ne.s32.totalorder %s173, %s174
      %p188 = scmp.eq.s32.totalorder %s29, 1
      %p189 = por %p187, %p188
      %p191 = scmp.ne.s32.totalorder %s174, %s190
      %p192 = scmp.eq.s32.totalorder %s29, 0
      %p193 = por %p191, %p192
      %p194 = scmp.le.s32.totalorder 1, %s23
      %p195 = scmp.lt.s32.totalorder %s23, 3
      %p196 = pnand %p194, %p195
      %p197 = pneg %p196
      // Predicated region
      $region9: #{tpu_custom_call.1} parent=5 // pred_check
        _
      $region10: #{tpu_custom_call.1} parent=5 // pred_check_branch
        %199 = sbr.rel (%p196) target = $region12
      $region11: #{tpu_custom_call.1} parent=5 // pred_region
        %s200 = ssub.s32 %s23, 1
      $region12: #{tpu_custom_call.1} parent=5 // pred_fallthru
        _
      %p201 = scmp.lt.s32.totalorder %s23, 2
      // Predicated region
      $region13: #{tpu_custom_call.1} parent=5 // pred_check
        %p202 = pneg %p201
      $region14: #{tpu_custom_call.1} parent=5 // pred_check_branch
        %204 = sbr.rel (%p202) target = $region16
      $region15: #{tpu_custom_call.1} parent=5 // pred_region
        // Predicated region
        $region17: #{tpu_custom_call.1} parent=15 // pred_check
          %p205 = pneg %p66
        $region18: #{tpu_custom_call.1} parent=15 // pred_check_branch
          %207 = sbr.rel (%p205) target = $region20
        $region19: #{tpu_custom_call.1} parent=15 // pred_region
          %s208 = sand.u32 %s56, 1
          %s209 = scalar_lea.sflag [#allocation3], %s208
          %s210 = sand.u32 %s56, 1
          %s211 = smul.addr %s210, 6
          %s212 = scalar_lea.vmem [#allocation2], %s211
          %s213 = sadd.s32 %s31, %s32
          %s215 = ssub.s32 96, 96
          %216 = vsyncadd %s209, %s215
          %s217 = smul.addr %s30, 3
          %s218 = sadd.s32 %s213, %s217
          %s219 = smul.addr %s218, 32
          %s220 = scalar_lea.hbm %s0, %s219
          %s221 = sshll.u32 %s212, 4
          %s222 = int_to_ptr.vmem [resolvable:$true] %s221
          %227 = dma.hbm_to_vmem [thread:$0]  %s220, 96, %s222, %s209, 32, 32, 2
        $region20: #{tpu_custom_call.1} parent=15 // pred_fallthru
          _
        // Predicated region
        $region21: #{tpu_custom_call.1} parent=15 // pred_check
          %p228 = pneg %p96
        $region22: #{tpu_custom_call.1} parent=15 // pred_check_branch
          %230 = sbr.rel (%p228) target = $region24
        $region23: #{tpu_custom_call.1} parent=15 // pred_region
          %s231 = sand.u32 %s86, 1
          %s232 = scalar_lea.sflag [#allocation6], %s231
          %s233 = sand.u32 %s86, 1
          %s234 = smul.addr %s233, 6
          %s235 = scalar_lea.vmem [#allocation5], %s234
          %s236 = sadd.s32 %s31, %s32
          %s238 = ssub.s32 96, 96
          %239 = vsyncadd %s232, %s238
          %s240 = smul.addr %s30, 3
          %s241 = sadd.s32 %s236, %s240
          %s242 = smul.addr %s241, 32
          %s243 = scalar_lea.hbm %s1, %s242
          %s244 = sshll.u32 %s235, 4
          %s245 = int_to_ptr.vmem [resolvable:$true] %s244
          %250 = dma.hbm_to_vmem [thread:$0]  %s243, 96, %s245, %s232, 32, 32, 2
        $region24: #{tpu_custom_call.1} parent=15 // pred_fallthru
          _
      $region16: #{tpu_custom_call.1} parent=5 // pred_fallthru
        _
      %p251 = scmp.le.s32.totalorder 1, %s23
      %p252 = scmp.lt.s32.totalorder %s23, 3
      %p253 = pnand %p251, %p252
      %p254 = pneg %p253
      // Predicated region
      $region25: #{tpu_custom_call.1} parent=5 // pred_check
        _
      $region26: #{tpu_custom_call.1} parent=5 // pred_check_branch
        %256 = sbr.rel (%p253) target = $region28
      $region27: #{tpu_custom_call.1} parent=5 // pred_region
        %s257 = ssub.s32 %s23, 1
        %s258 = sand.u32 %s59, 1
        %s259 = scalar_lea.sflag [#allocation3], %s258
        %s260 = sand.u32 %s59, 1
        %s261 = smul.addr %s260, 6
        %s262 = scalar_lea.vmem [#allocation2], %s261
        // Predicated region
        $region29: #{tpu_custom_call.1} parent=27 // pred_check
          %p263 = pneg %p72
        $region30: #{tpu_custom_call.1} parent=27 // pred_check_branch
          %265 = sbr.rel (%p263) target = $region32
        $region31: #{tpu_custom_call.1} parent=27 // pred_region
          %266 = dma.done %s259, 96
        $region32: #{tpu_custom_call.1} parent=27 // pred_fallthru
          _
        %s267 = sand.u32 %s89, 1
        %s268 = scalar_lea.sflag [#allocation6], %s267
        %s269 = sand.u32 %s89, 1
        %s270 = smul.addr %s269, 6
        %s271 = scalar_lea.vmem [#allocation5], %s270
        // Predicated region
        $region33: #{tpu_custom_call.1} parent=27 // pred_check
          %p272 = pneg %p102
        $region34: #{tpu_custom_call.1} parent=27 // pred_check_branch
          %274 = sbr.rel (%p272) target = $region36
        $region35: #{tpu_custom_call.1} parent=27 // pred_region
          %275 = dma.done %s268, 96
        $region36: #{tpu_custom_call.1} parent=27 // pred_fallthru
          _
        %s276 = sand.u32 %s59, 1
        %s277 = scalar_lea.sflag [#allocation3], %s276
        %s278 = sand.u32 %s59, 1
        %s279 = smul.addr %s278, 6
        %s280 = scalar_lea.vmem [#allocation2], %s279
        %p281 = pneg %p72
        %p282 = pneg %p69
        %s283 = sand.u32 %s89, 1
        %s284 = scalar_lea.sflag [#allocation6], %s283
        %s285 = sand.u32 %s89, 1
        %s286 = smul.addr %s285, 6
        %s287 = scalar_lea.vmem [#allocation5], %s286
        %p288 = pneg %p102
        %p289 = pneg %p99
        %p290 = pneg %p130
        %p291 = pneg %p127
        %s292 = sand.u32 %s117, 1
        %s293 = scalar_lea.sflag [#allocation4], %s292
        %s294 = sand.u32 %s117, 1
        %s295 = smul.addr %s294, 3
        %s296 = scalar_lea.vmem [#allocation7], %s295
        %p297 = pneg %p158
        %p298 = pneg %p155
        %s299 = sand.u32 %s28, 1
        %s300 = scalar_lea.sflag [#allocation9], %s299
        %s301 = sand.u32 %s145, 1
        %s302 = smul.addr %s301, 3
        %s303 = scalar_lea.vmem [#allocation8], %s302
        %p304 = pneg %p186
        %p305 = pneg %p183
        %s306 = sand.u32 %s28, 1
        %s307 = scalar_lea.sflag [#allocation9], %s306
        %s308 = sand.u32 %s173, 1
        %s309 = smul.addr %s308, 3
        %s310 = scalar_lea.vmem [#allocation10], %s309
        %s311 = sadd.s32 %s34, %s35
        %s312 = sadd.s32 %s34, %s35
        %s313 = sadd.s32 %s33, %s34
        %s314 = sadd.s32 %s33, %s34
        %s315 = sadd.s32 %s33, %s34
        %p316 = scmp.eq.s32.totalorder %s35, 0
        // Predicated region
        $region37: #{tpu_custom_call.1} parent=27 // pred_check
          %p317 = pneg %p316
        $region38: #{tpu_custom_call.1} parent=27 // pred_check_branch
          %319 = sbr.rel (%p317) target = $region40
        $region39: #{tpu_custom_call.1} parent=27 // pred_region
          %320 = vst [vmem:[%s296] sm:$0x1] 0.0
          %321 = vst [vmem:[%s296 + $0x1] sm:$0x1] 0.0
          %322 = vst [vmem:[%s296 + $0x2] sm:$0x1] 0.0
          %323 = vst [vmem:[%s303] sm:$0x1] 0.0
          %324 = vst [vmem:[%s303 + $0x1] sm:$0x1] 0.0
          %325 = vst [vmem:[%s303 + $0x2] sm:$0x1] 0.0
          %326 = vst [vmem:[%s310] sm:$0x1] 0.0
          %327 = vst [vmem:[%s310 + $0x1] sm:$0x1] 0.0
          %328 = vst [vmem:[%s310 + $0x2] sm:$0x1] 0.0
        $region40: #{tpu_custom_call.1} parent=27 // pred_fallthru
          _
        %v329 = vld [vmem:[%s262] sm:$0x3]
        %v330 = vld [vmem:[%s262 + $0x2] sm:$0x3]
        %v331 = vld [vmem:[%s262 + $0x4] sm:$0x3]
        %v332 = vld [vmem:[%s271] sm:$0x3]
        %v333 = vld [vmem:[%s271 + $0x2] sm:$0x3]
        %v334 = vld [vmem:[%s271 + $0x4] sm:$0x3]
        %v335 = vmul.f32 %v329, 0.5
        %v336 = vmul.f32 %v330, 0.5
        %v337 = vmul.f32 %v331, 0.5
        %v338 = vtanh.pop %v335
        %v339 = vtanh.pop %v336
        %v340 = vtanh.pop %v337
        %v341 = vadd.f32 %v338, 1.0
        %v342 = vadd.f32 %v339, 1.0
        %v343 = vadd.f32 %v340, 1.0
        %v344 = vmul.f32 %v341, 0.5
        %v345 = vmul.f32 %v342, 0.5
        %v346 = vmul.f32 %v343, 0.5
        %v347 = vmul.f32 %v344, %v332
        %v348 = vmul.f32 %v345, %v333
        %v349 = vmul.f32 %v346, %v334
        %v350 = vmul.f32 %v344, %v344
        %v351 = vmul.f32 %v345, %v345
        %v352 = vmul.f32 %v346, %v346
        %v353 = vmul.f32 %v332, %v332
        %v354 = vmul.f32 %v333, %v333
        %v355 = vmul.f32 %v334, %v334
        %v356 = vld [vmem:[%s296] sm:$0x1]
        %v357 = vld [vmem:[%s296 + $0x1] sm:$0x1]
        %v358 = vld [vmem:[%s296 + $0x2] sm:$0x1]
        %vm359 = vcmask 1041408
        %v360 = vsel %vm359, %v347, 0.0
        %v361 = vrot.slane %v360, 4
        %v362 = vadd.f32 %v360, %v361
        %v363 = vrot.slane %v362, 2
        %v364 = vadd.f32 %v362, %v363
        %v365 = vrot.slane %v364, 1
        %v366 = vadd.f32 %v364, %v365
        %v367 = vsel %vm359, %v348, 0.0
        %v368 = vrot.slane %v367, 4
        %v369 = vadd.f32 %v367, %v368
        %v370 = vrot.slane %v369, 2
        %v371 = vadd.f32 %v369, %v370
        %v372 = vrot.slane %v371, 1
        %v373 = vadd.f32 %v371, %v372
        %v374 = vsel %vm359, %v349, 0.0
        %v375 = vrot.slane %v374, 4
        %v376 = vadd.f32 %v374, %v375
        %v377 = vrot.slane %v376, 2
        %v378 = vadd.f32 %v376, %v377
        %v379 = vrot.slane %v378, 1
        %v380 = vadd.f32 %v378, %v379
        %v381 = vadd.f32 %v356, %v366
        %v382 = vadd.f32 %v357, %v373
        %v383 = vadd.f32 %v358, %v380
        %384 = vst [vmem:[%s296] sm:$0x1] %v381
        %385 = vst [vmem:[%s296 + $0x1] sm:$0x1] %v382
        %386 = vst [vmem:[%s296 + $0x2] sm:$0x1] %v383
        %v387 = vld [vmem:[%s303] sm:$0x1]
        %v388 = vld [vmem:[%s303 + $0x1] sm:$0x1]
        %v389 = vld [vmem:[%s303 + $0x2] sm:$0x1]
        %v390 = vsel %vm359, %v350, 0.0
        %v391 = vrot.slane %v390, 4
        %v392 = vadd.f32 %v390, %v391
        %v393 = vrot.slane %v392, 2
        %v394 = vadd.f32 %v392, %v393
        %v395 = vrot.slane %v394, 1
        %v396 = vadd.f32 %v394, %v395
        %v397 = vsel %vm359, %v351, 0.0
        %v398 = vrot.slane %v397, 4
        %v399 = vadd.f32 %v397, %v398
        %v400 = vrot.slane %v399, 2
        %v401 = vadd.f32 %v399, %v400
        %v402 = vrot.slane %v401, 1
        %v403 = vadd.f32 %v401, %v402
        %v404 = vsel %vm359, %v352, 0.0
        %v405 = vrot.slane %v404, 4
        %v406 = vadd.f32 %v404, %v405
        %v407 = vrot.slane %v406, 2
        %v408 = vadd.f32 %v406, %v407
        %v409 = vrot.slane %v408, 1
        %v410 = vadd.f32 %v408, %v409
        %v411 = vadd.f32 %v387, %v396
        %v412 = vadd.f32 %v388, %v403
        %v413 = vadd.f32 %v389, %v410
        %414 = vst [vmem:[%s303] sm:$0x1] %v411
        %415 = vst [vmem:[%s303 + $0x1] sm:$0x1] %v412
        %416 = vst [vmem:[%s303 + $0x2] sm:$0x1] %v413
        %v417 = vld [vmem:[%s310] sm:$0x1]
        %v418 = vld [vmem:[%s310 + $0x1] sm:$0x1]
        %v419 = vld [vmem:[%s310 + $0x2] sm:$0x1]
        %v420 = vsel %vm359, %v353, 0.0
        %v421 = vrot.slane %v420, 4
        %v422 = vadd.f32 %v420, %v421
        %v423 = vrot.slane %v422, 2
        %v424 = vadd.f32 %v422, %v423
        %v425 = vrot.slane %v424, 1
        %v426 = vadd.f32 %v424, %v425
        %v427 = vsel %vm359, %v354, 0.0
        %v428 = vrot.slane %v427, 4
        %v429 = vadd.f32 %v427, %v428
        %v430 = vrot.slane %v429, 2
        %v431 = vadd.f32 %v429, %v430
        %v432 = vrot.slane %v431, 1
        %v433 = vadd.f32 %v431, %v432
        %v434 = vsel %vm359, %v355, 0.0
        %v435 = vrot.slane %v434, 4
        %v436 = vadd.f32 %v434, %v435
        %v437 = vrot.slane %v436, 2
        %v438 = vadd.f32 %v436, %v437
        %v439 = vrot.slane %v438, 1
        %v440 = vadd.f32 %v438, %v439
        %v441 = vadd.f32 %v417, %v426
        %v442 = vadd.f32 %v418, %v433
        %v443 = vadd.f32 %v419, %v440
        %444 = vst [vmem:[%s310] sm:$0x1] %v441
        %445 = vst [vmem:[%s310 + $0x1] sm:$0x1] %v442
        %446 = vst [vmem:[%s310 + $0x2] sm:$0x1] %v443
        %s447 = sand.u32 %s117, 1
        %s448 = scalar_lea.sflag [#allocation4], %s447
        %s449 = sand.u32 %s117, 1
        %s450 = smul.addr %s449, 3
        %s451 = scalar_lea.vmem [#allocation7], %s450
        %s452 = sand.u32 %s28, 1
        %s453 = scalar_lea.sflag [#allocation9], %s452
        %s454 = sand.u32 %s145, 1
        %s455 = smul.addr %s454, 3
        %s456 = scalar_lea.vmem [#allocation8], %s455
        %s457 = sand.u32 %s28, 1
        %s458 = scalar_lea.sflag [#allocation9], %s457
        %s459 = sand.u32 %s173, 1
        %s460 = smul.addr %s459, 3
        %s461 = scalar_lea.vmem [#allocation10], %s460
        // Predicated region
        $region41: #{tpu_custom_call.1} parent=27 // pred_check
          %p462 = pneg %p127
        $region42: #{tpu_custom_call.1} parent=27 // pred_check_branch
          %464 = sbr.rel (%p462) target = $region44
        $region43: #{tpu_custom_call.1} parent=27 // pred_region
          %s465 = sadd.s32 %s33, %s34
          %s467 = ssub.s32 48, 48
          %468 = vsyncadd %s448, %s467
          %s469 = smul.addr %s465, 3
          %s470 = smul.addr %s469, 16
          %s471 = scalar_lea.hbm %s2, %s470
          %s472 = sshll.u32 %s451, 4
          %s473 = int_to_ptr.vmem [resolvable:$true] %s472
          %478 = dma.vmem_to_hbm [thread:$0]  %s473, 48, %s471, %s448, 16, 16, 1
        $region44: #{tpu_custom_call.1} parent=27 // pred_fallthru
          _
        // Predicated region
        $region45: #{tpu_custom_call.1} parent=27 // pred_check
          %p479 = pneg %p155
        $region46: #{tpu_custom_call.1} parent=27 // pred_check_branch
          %481 = sbr.rel (%p479) target = $region48
        $region47: #{tpu_custom_call.1} parent=27 // pred_region
          %s482 = sadd.s32 %s33, %s34
          %s484 = ssub.s32 48, 48
          %485 = vsyncadd %s453, %s484
          %s486 = smul.addr %s482, 3
          %s487 = smul.addr %s486, 16
          %s488 = scalar_lea.hbm %s3, %s487
          %s489 = sshll.u32 %s456, 4
          %s490 = int_to_ptr.vmem [resolvable:$true] %s489
          %495 = dma.vmem_to_hbm [thread:$0]  %s490, 48, %s488, %s453, 16, 16, 1
        $region48: #{tpu_custom_call.1} parent=27 // pred_fallthru
          _
        // Predicated region
        $region49: #{tpu_custom_call.1} parent=27 // pred_check
          %p496 = pneg %p183
        $region50: #{tpu_custom_call.1} parent=27 // pred_check_branch
          %498 = sbr.rel (%p496) target = $region52
        $region51: #{tpu_custom_call.1} parent=27 // pred_region
          %s499 = sadd.s32 %s33, %s34
          %s501 = ssub.s32 48, 48
          %502 = vsyncadd %s458, %s501
          %s503 = smul.addr %s499, 3
          %s504 = smul.addr %s503, 16
          %s505 = scalar_lea.hbm %s4, %s504
          %s506 = sshll.u32 %s461, 4
          %s507 = int_to_ptr.vmem [resolvable:$true] %s506
          %512 = dma.vmem_to_hbm [thread:$0]  %s507, 48, %s505, %s458, 16, 16, 1
        $region52: #{tpu_custom_call.1} parent=27 // pred_fallthru
          _
      $region28: #{tpu_custom_call.1} parent=5 // pred_fallthru
        _
      %p513 = scmp.le.s32.totalorder 2, %s23
      // Predicated region
      $region53: #{tpu_custom_call.1} parent=5 // pred_check
        %p514 = pneg %p513
      $region54: #{tpu_custom_call.1} parent=5 // pred_check_branch
        %516 = sbr.rel (%p514) target = $region56
      $region55: #{tpu_custom_call.1} parent=5 // pred_region
        %s517 = ssub.s32 %s23, 2
        // Predicated region
        $region57: #{tpu_custom_call.1} parent=55 // pred_check
          %p518 = pneg %p133
        $region58: #{tpu_custom_call.1} parent=55 // pred_check_branch
          %520 = sbr.rel (%p518) target = $region60
        $region59: #{tpu_custom_call.1} parent=55 // pred_region
          %s521 = sand.u32 %s118, 1
          %s522 = scalar_lea.sflag [#allocation4], %s521
          %s523 = sand.u32 %s118, 1
          %s524 = smul.addr %s523, 3
          %s525 = scalar_lea.vmem [#allocation7], %s524
          %526 = dma.done %s522, 48
        $region60: #{tpu_custom_call.1} parent=55 // pred_fallthru
          _
        // Predicated region
        $region61: #{tpu_custom_call.1} parent=55 // pred_check
          %p527 = pneg %p161
        $region62: #{tpu_custom_call.1} parent=55 // pred_check_branch
          %529 = sbr.rel (%p527) target = $region64
        $region63: #{tpu_custom_call.1} parent=55 // pred_region
          %s530 = sand.u32 %s29, 1
          %s531 = scalar_lea.sflag [#allocation9], %s530
          %s532 = sand.u32 %s146, 1
          %s533 = smul.addr %s532, 3
          %s534 = scalar_lea.vmem [#allocation8], %s533
          %535 = dma.done %s531, 48
        $region64: #{tpu_custom_call.1} parent=55 // pred_fallthru
          _
        // Predicated region
        $region65: #{tpu_custom_call.1} parent=55 // pred_check
          %p536 = pneg %p189
        $region66: #{tpu_custom_call.1} parent=55 // pred_check_branch
          %538 = sbr.rel (%p536) target = $region68
        $region67: #{tpu_custom_call.1} parent=55 // pred_region
          %s539 = sand.u32 %s29, 1
          %s540 = scalar_lea.sflag [#allocation9], %s539
          %s541 = sand.u32 %s174, 1
          %s542 = smul.addr %s541, 3
          %s543 = scalar_lea.vmem [#allocation10], %s542
          %544 = dma.done %s540, 48
        $region68: #{tpu_custom_call.1} parent=55 // pred_fallthru
          _
      $region56: #{tpu_custom_call.1} parent=5 // pred_fallthru
        _
    $region6: #{tpu_custom_call.1} parent=1 // loop_footer
      %s27 = sadd.s32 1, %s23
    $region7: #{tpu_custom_call.1} parent=1 // loop_footer_branch
      %22 = sbr.rel target = $region3
    $region8: #{tpu_custom_call.1} parent=1 // loop_exit
      _
    %545 = vsyncpa [#allocation3], 1
    %s546 = scalar_lea.sflag [#allocation3], 1
    %547 = vsyncpa %s546, 1
    %548 = vsyncpa [#allocation6], 1
    %s549 = scalar_lea.sflag [#allocation6], 1
    %550 = vsyncpa %s549, 1
    %551 = vsyncpa [#allocation4], 1
    %s552 = scalar_lea.sflag [#allocation4], 1
    %553 = vsyncpa %s552, 1
    %554 = vsyncpa [#allocation9], 1
    %s555 = scalar_lea.sflag [#allocation9], 1
    %556 = vsyncpa %s555, 1

</llo_original>
